<compile_context>
chip_gen: v7x
topology: tpu7x:2x2x1
jax: 0.10.0
libtpu: 0.0.40
codegen_flags: <defaults>
</compile_context>

<pallas_src>
import functools

import jax
import jax.numpy as jnp
from jax.experimental import pallas as pl
from jax.experimental.pallas import tpu as pltpu


def _round_up(x, m):
    return ((x + m - 1) // m) * m


def _ce_sum_kernel(h_ref, lab_ref, out_ref, acc_ref, *, n_rows, tile_n, chunk,
                   n_chunks, blocks_per_core):
    core = pl.program_id(0)
    i = pl.program_id(1)

    @pl.when(i == 0)
    def _():
        acc_ref[...] = jnp.zeros_like(acc_ref)

    C = h_ref.shape[1]
    # Logical (unclamped) first row of this grid step. The index_map clamps the
    # DMA source block, but the validity mask below uses the logical position,
    # so duplicated / padded rows contribute exactly zero.
    row0 = (core * blocks_per_core + i) * tile_n

    # Hoisted iotas, reused by every sub-chunk (JAX does not CSE broadcasts).
    col = jax.lax.broadcasted_iota(jnp.int32, (chunk, C), 1)            # class id
    row_in_chunk = jax.lax.broadcasted_iota(jnp.int32, (chunk, 1), 0)   # row id

    for c in range(n_chunks):  # static inner loop -> static VMEM slices
        r0 = c * chunk
        hc = h_ref[pl.ds(r0, chunk), :].astype(jnp.float32)   # (chunk, C)
        lc = lab_ref[pl.ds(r0, chunk), :]                     # (chunk, 1) int32

        # numerically-stable per-row logsumexp
        m = jnp.max(hc, axis=-1, keepdims=True)
        lse = jnp.log(jnp.sum(jnp.exp(hc - m), axis=-1, keepdims=True)) + m
        # logit at the label index via one-hot select (no scalar gather)
        picked = jnp.sum(jnp.where(col == lc, hc, 0.0), axis=-1, keepdims=True)

        valid = (row0 + r0 + row_in_chunk) < n_rows           # (chunk, 1) bool
        # elementwise vector accumulate; no cross-lane reduce in steady state
        acc_ref[...] += jnp.where(valid, lse - picked, 0.0)

    @pl.when(i == pl.num_programs(1) - 1)
    def _():
        # single cross-sublane reduce + scalar store, once per core
        out_ref[...] = jnp.sum(acc_ref[...]).reshape(1, 1, 1)


def cross_entropy_sum(h, labels, *, chunk=256, target_block_bytes=512 * 1024):
    """CrossEntropyLoss(reduction='sum') for logits h:(N, C), labels:(N,) ints."""
    n_rows, C = h.shape
    itemsize = jnp.dtype(h.dtype).itemsize

    # Keep one sub-chunk of logits modest even for very large class counts.
    if C * itemsize * chunk > 4 * 1024 * 1024:
        chunk = max(8, ((4 * 1024 * 1024) // (C * itemsize)) // 8 * 8)

    labels = labels.astype(jnp.int32)
    N = n_rows
    if N % 8 != 0:  # pad rows to the sublane multiple; padded rows are masked
        pad = _round_up(N, 8) - N
        h = jnp.pad(h, ((0, pad), (0, 0)))
        labels = jnp.pad(labels, ((0, pad),))
        N += pad

    if N <= chunk:
        chunk = N                      # single small chunk (N is a multiple of 8)

    # rows per grid step: multiple of `chunk`, ~target_block_bytes of logits,
    # bounded so the inner loop unrolls at most 16x and never exceeds the array.
    rows_for_target = max(1, target_block_bytes // (C * itemsize))
    tile_n = (rows_for_target // chunk) * chunk
    tile_n = min(tile_n, 16 * chunk, (N // chunk) * chunk)
    tile_n = max(tile_n, chunk)
    n_chunks = tile_n // chunk

    grid_n = pl.cdiv(N, tile_n)
    num_cores = 2                      # v7x megacore split; harmless on 1-TC chips
    bpc = pl.cdiv(grid_n, num_cores)

    def row_block(c, i):
        # Clamp so out-of-range logical blocks re-read the last real block;
        # their contribution is masked to zero inside the kernel.
        return (jnp.minimum(c * bpc + i, grid_n - 1), 0)

    kernel = functools.partial(
        _ce_sum_kernel, n_rows=n_rows, tile_n=tile_n, chunk=chunk,
        n_chunks=n_chunks, blocks_per_core=bpc)

    partials = pl.pallas_call(
        kernel,
        out_shape=jax.ShapeDtypeStruct((num_cores, 1, 1), jnp.float32),
        grid_spec=pltpu.PrefetchScalarGridSpec(
            num_scalar_prefetch=0,
            grid=(num_cores, bpc),
            in_specs=[
                pl.BlockSpec((tile_n, C), row_block),   # logits, native dtype
                pl.BlockSpec((tile_n, 1), row_block),   # labels
            ],
            out_specs=pl.BlockSpec((1, 1, 1), lambda c, i: (c, 0, 0)),
            scratch_shapes=[pltpu.VMEM((chunk, 1), jnp.float32)],
        ),
        compiler_params=pltpu.CompilerParams(
            dimension_semantics=("parallel", "arbitrary"),
        ),
    )(h, labels.reshape(N, 1))

    return jnp.sum(partials)


class GCNUturn:
    """JAX/Pallas port of the PyTorch module: nn.CrossEntropyLoss(reduction='sum')."""

    def __call__(self, h, labels):
        return cross_entropy_sum(h, labels)


if __name__ == "__main__":
    key = jax.random.PRNGKey(0)
    k1, k2 = jax.random.split(key)

    model = GCNUturn()

    # Primary small test: 16 samples, 32 classes.
    N, C = 16, 32
    h = jax.random.normal(k1, (N, C), dtype=jnp.float32)
    labels = jax.random.randint(k2, (N,), 0, C, dtype=jnp.int32)
    loss = jax.block_until_ready(model(h, labels))
    ref = jnp.sum(jax.nn.logsumexp(h, axis=-1) - h[jnp.arange(N), labels])
    assert jnp.allclose(loss, ref, rtol=2e-5, atol=1e-3), (loss, ref)

    # Secondary test exercising multi-block grid, the 2-way core split and the
    # row-remainder masking (N not a multiple of the tile size).
    N2, C2 = 300, 32
    k3, k4 = jax.random.split(k1)
    h2 = jax.random.normal(k3, (N2, C2), dtype=jnp.float32)
    labels2 = jax.random.randint(k4, (N2,), 0, C2, dtype=jnp.int32)
    loss2 = jax.block_until_ready(model(h2, labels2))
    ref2 = jnp.sum(jax.nn.logsumexp(h2, axis=-1) - h2[jnp.arange(N2), labels2])
    assert jnp.allclose(loss2, ref2, rtol=2e-5, atol=1e-3), (loss2, ref2)

    print("KERNEL_OK")
</pallas_src>

<mosaic_0001>
module attributes {stable_mosaic.version = 11 : i64} {
  func.func @_ce_sum_kernel(%arg0: i32, %arg1: i32, %arg2: memref<16x32xf32, #tpu.memory_space<vmem>>, %arg3: memref<16x1xi32, #tpu.memory_space<vmem>>, %arg4: memref<1x1x1xf32, #tpu.memory_space<vmem>>, %arg5: memref<16x1xf32, #tpu.memory_space<vmem>>) attributes {dimension_semantics = [#tpu.dimension_semantics<parallel>, #tpu.dimension_semantics<arbitrary>], iteration_bounds = array<i64: 2, 1>, scalar_prefetch = 0 : i64, scratch_operands = 1 : i64, tpu.core_type = #tpu.core_type<tc>, window_params = [{transform_indices = @transform_0, window_bounds = array<i64: 16, 32>}, {transform_indices = @transform_1, window_bounds = array<i64: 16, 1>}, {transform_indices = @transform_2, window_bounds = array<i64: 1, 1, 1>}]} {
    %c0_i32 = arith.constant 0 : i32
    %0 = arith.cmpi eq, %arg1, %c0_i32 : i32
    %1 = arith.extui %0 : i1 to i32
    %c0_i32_0 = arith.constant 0 : i32
    %2 = arith.cmpi ne, %1, %c0_i32_0 : i32
    scf.if %2 {
      %cst_16 = arith.constant 0.000000e+00 : f32
      %39 = vector.broadcast %cst_16 : f32 to vector<16x1xf32>
      %c0_17 = arith.constant 0 : index
      %c0_18 = arith.constant 0 : index
      %40 = vector.load %arg5[%c0_17, %c0_18] : memref<16x1xf32, #tpu.memory_space<vmem>>, vector<16x1xf32>
      tpu.vector_store %arg5[%c0_17, %c0_18], %39 {strides = array<i32>} : memref<16x1xf32, #tpu.memory_space<vmem>>, vector<16x1xf32>,
    } else {
    }
    %c1_i32 = arith.constant 1 : i32
    %3 = arith.muli %arg0, %c1_i32 : i32
    %4 = arith.addi %3, %arg1 : i32
    %c16_i32 = arith.constant 16 : i32
    %5 = arith.muli %4, %c16_i32 : i32
    %6 = tpu.iota {dimensions = array<i32: 1>} : vector<16x32xi32>
    %7 = tpu.iota {dimensions = array<i32: 0>} : vector<16x1xi32>
    %c0 = arith.constant 0 : index
    %c0_1 = arith.constant 0 : index
    %8 = vector.load %arg2[%c0, %c0_1] : memref<16x32xf32, #tpu.memory_space<vmem>>, vector<16x32xf32>
    %c0_2 = arith.constant 0 : index
    %c0_3 = arith.constant 0 : index
    %9 = vector.load %arg3[%c0_2, %c0_3] : memref<16x1xi32, #tpu.memory_space<vmem>>, vector<16x1xi32>
    %cst = arith.constant dense<0xFF800000> : vector<16xf32>
    %10 = vector.multi_reduction <maximumf>, %8, %cst [1] : vector<16x32xf32> to vector<16xf32>
    %11 = vector.shape_cast %10 : vector<16xf32> to vector<16x1xf32>
    %12 = vector.broadcast %11 : vector<16x1xf32> to vector<16x32xf32>
    %13 = arith.subf %8, %12 : vector<16x32xf32>
    %14 = math.exp %13 : vector<16x32xf32>
    %cst_4 = arith.constant dense<0.000000e+00> : vector<16xf32>
    %15 = vector.multi_reduction <add>, %14, %cst_4 [1] : vector<16x32xf32> to vector<16xf32>
    %16 = vector.shape_cast %15 : vector<16xf32> to vector<16x1xf32>
    %17 = math.log %16 : vector<16x1xf32>
    %18 = arith.addf %17, %11 : vector<16x1xf32>
    %19 = vector.broadcast %9 : vector<16x1xi32> to vector<16x32xi32>
    %20 = arith.cmpi eq, %6, %19 : vector<16x32xi32>
    %cst_5 = arith.constant 0.000000e+00 : f32
    %21 = vector.broadcast %cst_5 : f32 to vector<16x32xf32>
    %22 = arith.select %20, %8, %21 : vector<16x32xi1>, vector<16x32xf32>
    %cst_6 = arith.constant dense<0.000000e+00> : vector<16xf32>
    %23 = vector.multi_reduction <add>, %22, %cst_6 [1] : vector<16x32xf32> to vector<16xf32>
    %24 = vector.shape_cast %23 : vector<16xf32> to vector<16x1xf32>
    %c0_i32_7 = arith.constant 0 : i32
    %25 = arith.addi %5, %c0_i32_7 : i32
    %26 = vector.broadcast %25 : i32 to vector<16x1xi32>
    %27 = arith.addi %26, %7 : vector<16x1xi32>
    %c16_i32_8 = arith.constant 16 : i32
    %28 = vector.broadcast %c16_i32_8 : i32 to vector<16x1xi32>
    %29 = arith.cmpi slt, %27, %28 : vector<16x1xi32>
    %c0_9 = arith.constant 0 : index
    %c0_10 = arith.constant 0 : index
    %30 = vector.load %arg5[%c0_9, %c0_10] : memref<16x1xf32, #tpu.memory_space<vmem>>, vector<16x1xf32>
    %31 = arith.subf %18, %24 : vector<16x1xf32>
    %cst_11 = arith.constant 0.000000e+00 : f32
    %32 = vector.broadcast %cst_11 : f32 to vector<16x1xf32>
    %33 = arith.select %29, %31, %32 : vector<16x1xi1>, vector<16x1xf32>
    %34 = arith.addf %30, %33 : vector<16x1xf32>
    %c0_12 = arith.constant 0 : index
    %c0_13 = arith.constant 0 : index
    %35 = vector.load %arg5[%c0_12, %c0_13] : memref<16x1xf32, #tpu.memory_space<vmem>>, vector<16x1xf32>
    tpu.vector_store %arg5[%c0_12, %c0_13], %34 {strides = array<i32>} : memref<16x1xf32, #tpu.memory_space<vmem>>, vector<16x1xf32>,
    %c0_i32_14 = arith.constant 0 : i32
    %36 = arith.cmpi eq, %arg1, %c0_i32_14 : i32
    %37 = arith.extui %36 : i1 to i32
    %c0_i32_15 = arith.constant 0 : i32
    %38 = arith.cmpi ne, %37, %c0_i32_15 : i32
    scf.if %38 {
      %c0_16 = arith.constant 0 : index
      %c0_17 = arith.constant 0 : index
      %39 = vector.load %arg5[%c0_16, %c0_17] : memref<16x1xf32, #tpu.memory_space<vmem>>, vector<16x1xf32>
      %40 = vector.shape_cast %39 : vector<16x1xf32> to vector<1x16x1xf32>
      %cst_18 = arith.constant dense<0.000000e+00> : vector<1xf32>
      %41 = vector.multi_reduction <add>, %40, %cst_18 [1, 2] : vector<1x16x1xf32> to vector<1xf32>
      %42 = vector.shape_cast %41 : vector<1xf32> to vector<1x1x1xf32>
      %43 = vector.extract %42[0, 0, 0] : f32 from vector<1x1x1xf32>
      %44 = vector.broadcast %43 : f32 to vector<1x1x1xf32>
      %c0_19 = arith.constant 0 : index
      %c0_20 = arith.constant 0 : index
      %c0_21 = arith.constant 0 : index
      %45 = vector.load %arg4[%c0_19, %c0_20, %c0_21] : memref<1x1x1xf32, #tpu.memory_space<vmem>>, vector<1x1x1xf32>
      tpu.vector_store %arg4[%c0_19, %c0_20, %c0_21], %44 {strides = array<i32>} : memref<1x1x1xf32, #tpu.memory_space<vmem>>, vector<1x1x1xf32>,
    } else {
    }
    return
  }
  func.func @transform_0(%arg0: i32, %arg1: i32) -> (i32, i32) {
    %c1_i32 = arith.constant 1 : i32
    %0 = arith.muli %arg0, %c1_i32 : i32
    %1 = arith.addi %0, %arg1 : i32
    %c0_i32 = arith.constant 0 : i32
    %2 = arith.minsi %1, %c0_i32 : i32
    %c0_i32_0 = arith.constant 0 : i32
    %c0_i32_1 = arith.constant 0 : i32
    return %2, %c0_i32_0 : i32, i32
  }
  func.func @transform_1(%arg0: i32, %arg1: i32) -> (i32, i32) {
    %c1_i32 = arith.constant 1 : i32
    %0 = arith.muli %arg0, %c1_i32 : i32
    %1 = arith.addi %0, %arg1 : i32
    %c0_i32 = arith.constant 0 : i32
    %2 = arith.minsi %1, %c0_i32 : i32
    %c0_i32_0 = arith.constant 0 : i32
    %c0_i32_1 = arith.constant 0 : i32
    return %2, %c0_i32_0 : i32, i32
  }
  func.func @transform_2(%arg0: i32, %arg1: i32) -> (i32, i32, i32) {
    %c0_i32 = arith.constant 0 : i32
    %c0_i32_0 = arith.constant 0 : i32
    %c0_i32_1 = arith.constant 0 : i32
    return %arg0, %c0_i32, %c0_i32_0 : i32, i32, i32
  }
}

</mosaic_0001>

<llo_original>
// kernel: tpu_custom_call.1
$region0: #{tpu_custom_call.1}
  #allocation0 [shape = 'u32[]', space=smem, size = 0x4, offset = 0x4, fixed_abs, tag = 'smem constant byte address 0x4 - core index']
  #allocation1 [shape = 'u32[144,128]{1,0:T(1,128)}', space=vmem, size = 0x12000, scoped, tag = 'internal scratch']
  #allocation2 [shape = 'f32[16,1]{1,0:T(8,128)}', space=vmem, size = 0x2000, scoped, tag = 'scratch operand']
  %s0 = inlined_call_operand.vmem [shape: f32[16,32], index: 0, kind: input, shape index: {}]
  %s1 = inlined_call_operand.vmem [shape: s32[16,1], index: 1, kind: input, shape index: {}]
  %s2 = inlined_call_operand.vmem [shape: f32[2,1,1], index: 2, kind: output, shape index: {}]
  %s3 = sld [smem:[#allocation0]]
  $region49: #{tpu_custom_call.1} parent=0
    _
  %s5 = ssub.s32 1, %s3
  %s6 = scalar_select 0, %s5, %s3
  loop: start=0, step=1, limit=4
  $region2: #{tpu_custom_call.1} parent=0 // loop_pre_header
    _
  $region3: #{tpu_custom_call.1} parent=0 // loop_header
    %s8 = sphi 0, %s12
    %p9 = scmp.ge.s32.totalorder %s8, 4
    %s15 = sphi 0, %s27
    %s16 = sphi 0, %s23
    %s17 = sphi 0, %s15
    %s18 = sphi 0, %s16
    %s19 = sphi 0, %s17
    %s20 = sphi 0, %s18
    %s36 = sphi 0, %s38
    %s39 = sphi 0, %s36
    %s40 = sphi 0, %s39
    %s56 = sphi 0, %s40
    %s68 = sphi 0, %s70
    %s71 = sphi 0, %s68
    %s72 = sphi 0, %s71
    %s88 = sphi 0, %s72
    %s94 = sphi 0, %s96
    %s97 = sphi 0, %s94
    %s98 = sphi 0, %s97
    %s114 = sphi 0, %s98
  $region4: #{tpu_custom_call.1} parent=0 // loop_header_branch
    %11 = sbr.rel (%p9) target = $region8
  $region5: #{tpu_custom_call.1} parent=0 // loop_body
    %s13 = ssub.s32 %s8, 1
    %s14 = ssub.s32 %s8, 2
    %s21 = sadd.s32 1, %s16
    %p22 = scmp.ge.s32.totalorder %s21, 1
    %s23 = scalar_select %p22, 0, %s21
    %s24 = sadd.s32 1, %s15
    %s25 = scalar_select %p22, %s24, %s15
    %p26 = scmp.ge.s32.totalorder %s25, 2
    %s27 = scalar_select %p26, 0, %s25
    %s28 = sadd.s32 %s15, %s16
    %p29 = scmp.lt.s32.totalorder %s28, 0
    %s30 = scalar_select %p29, %s28, 0
    %s31 = sadd.s32 %s27, %s23
    %p32 = scmp.lt.s32.totalorder %s31, 0
    %s33 = scalar_select %p32, %s31, 0
    %s34 = ssub.s32 %s30, %s33
    %p35 = scmp.eq.s32.totalorder %s34, 0
    %s37 = sadd.s32 %s36, 1
    %s38 = scalar_select %p35, %s36, %s37
    %p41 = pneg %p35
    %p42 = scmp.eq.s32.totalorder %s8, 1
    %p43 = por %p41, %p42
    %p44 = scmp.ne.s32.totalorder %s36, %s39
    %p45 = scmp.eq.s32.totalorder %s8, 0
    %p46 = por %p44, %p45
    %p47 = scmp.ne.s32.totalorder %s36, %s39
    %p48 = scmp.eq.s32.totalorder %s13, 1
    %p49 = por %p47, %p48
    %p50 = scmp.ne.s32.totalorder %s39, %s40
    %p51 = scmp.eq.s32.totalorder %s13, 0
    %p52 = por %p50, %p51
    %p53 = scmp.ne.s32.totalorder %s39, %s40
    %p54 = scmp.eq.s32.totalorder %s14, 1
    %p55 = por %p53, %p54
    %p57 = scmp.ne.s32.totalorder %s40, %s56
    %p58 = scmp.eq.s32.totalorder %s14, 0
    %p59 = por %p57, %p58
    %s60 = sadd.s32 %s15, %s16
    %p61 = scmp.lt.s32.totalorder %s60, 0
    %s62 = scalar_select %p61, %s60, 0
    %s63 = sadd.s32 %s27, %s23
    %p64 = scmp.lt.s32.totalorder %s63, 0
    %s65 = scalar_select %p64, %s63, 0
    %s66 = ssub.s32 %s62, %s65
    %p67 = scmp.eq.s32.totalorder %s66, 0
    %s69 = sadd.s32 %s68, 1
    %s70 = scalar_select %p67, %s68, %s69
    %p73 = pneg %p67
    %p74 = scmp.eq.s32.totalorder %s8, 1
    %p75 = por %p73, %p74
    %p76 = scmp.ne.s32.totalorder %s68, %s71
    %p77 = scmp.eq.s32.totalorder %s8, 0
    %p78 = por %p76, %p77
    %p79 = scmp.ne.s32.totalorder %s68, %s71
    %p80 = scmp.eq.s32.totalorder %s13, 1
    %p81 = por %p79, %p80
    %p82 = scmp.ne.s32.totalorder %s71, %s72
    %p83 = scmp.eq.s32.totalorder %s13, 0
    %p84 = por %p82, %p83
    %p85 = scmp.ne.s32.totalorder %s71, %s72
    %p86 = scmp.eq.s32.totalorder %s14, 1
    %p87 = por %p85, %p86
    %p89 = scmp.ne.s32.totalorder %s72, %s88
    %p90 = scmp.eq.s32.totalorder %s14, 0
    %p91 = por %p89, %p90
    %s92 = ssub.s32 %s15, %s27
    %p93 = scmp.eq.s32.totalorder %s92, 0
    %s95 = sadd.s32 %s94, 1
    %s96 = scalar_select %p93, %s94, %s95
    %p99 = pneg %p93
    %p100 = scmp.eq.s32.totalorder %s8, 1
    %p101 = por %p99, %p100
    %p102 = scmp.ne.s32.totalorder %s94, %s97
    %p103 = scmp.eq.s32.totalorder %s8, 0
    %p104 = por %p102, %p103
    %p105 = scmp.ne.s32.totalorder %s94, %s97
    %p106 = scmp.eq.s32.totalorder %s13, 1
    %p107 = por %p105, %p106
    %p108 = scmp.ne.s32.totalorder %s97, %s98
    %p109 = scmp.eq.s32.totalorder %s13, 0
    %p110 = por %p108, %p109
    %p111 = scmp.ne.s32.totalorder %s97, %s98
    %p112 = scmp.eq.s32.totalorder %s14, 1
    %p113 = por %p111, %p112
    %p115 = scmp.ne.s32.totalorder %s98, %s114
    %p116 = scmp.eq.s32.totalorder %s14, 0
    %p117 = por %p115, %p116
    %p118 = scmp.le.s32.totalorder 1, %s8
    %p119 = scmp.lt.s32.totalorder %s8, 3
    %p120 = pnand %p118, %p119
    %p121 = pneg %p120
    // Predicated region
    $region9: #{tpu_custom_call.1} parent=5 // pred_check
      _
    $region10: #{tpu_custom_call.1} parent=5 // pred_check_branch
      %123 = sbr.rel (%p120) target = $region12
    $region11: #{tpu_custom_call.1} parent=5 // pred_region
      %s124 = ssub.s32 %s8, 1
    $region12: #{tpu_custom_call.1} parent=5 // pred_fallthru
      _
    %p125 = scmp.lt.s32.totalorder %s8, 2
    // Predicated region
    $region13: #{tpu_custom_call.1} parent=5 // pred_check
      %p126 = pneg %p125
    $region14: #{tpu_custom_call.1} parent=5 // pred_check_branch
      %128 = sbr.rel (%p126) target = $region16
    $region15: #{tpu_custom_call.1} parent=5 // pred_region
      // Predicated region
      $region17: #{tpu_custom_call.1} parent=15 // pred_check
        %p129 = pneg %p46
      $region18: #{tpu_custom_call.1} parent=15 // pred_check_branch
        %131 = sbr.rel (%p129) target = $region20
      $region19: #{tpu_custom_call.1} parent=15 // pred_region
        %s132 = sadd.s32 %s15, %s16
        %p133 = scmp.lt.s32.totalorder %s132, 0
        %s134 = scalar_select %p133, %s132, 0
        %s135 = smul.u32 2, %s134
        %p136 = scmp.lt.s32.totalorder %s135, 1
        %s137 = scalar_select %p136, %s135, 1
        %s138 = smul.addr %s137, 8
        %s139 = scalar_lea.vmem %s0, %s138
        %s140 = sadd.s32 %s15, %s16
        %p141 = scmp.lt.s32.totalorder %s140, 0
        %s142 = scalar_select %p141, %s140, 0
        %s143 = smul.u32 2, %s142
      $region20: #{tpu_custom_call.1} parent=15 // pred_fallthru
        _
      // Predicated region
      $region21: #{tpu_custom_call.1} parent=15 // pred_check
        %p144 = pneg %p78
      $region22: #{tpu_custom_call.1} parent=15 // pred_check_branch
        %146 = sbr.rel (%p144) target = $region24
      $region23: #{tpu_custom_call.1} parent=15 // pred_region
        %s147 = sadd.s32 %s15, %s16
        %p148 = scmp.lt.s32.totalorder %s147, 0
        %s149 = scalar_select %p148, %s147, 0
        %s150 = smul.u32 2, %s149
        %p151 = scmp.lt.s32.totalorder %s150, 1
        %s152 = scalar_select %p151, %s150, 1
        %s153 = smul.addr %s152, 8
        %s154 = scalar_lea.vmem %s1, %s153
        %s155 = sadd.s32 %s15, %s16
        %p156 = scmp.lt.s32.totalorder %s155, 0
        %s157 = scalar_select %p156, %s155, 0
        %s158 = smul.u32 2, %s157
      $region24: #{tpu_custom_call.1} parent=15 // pred_fallthru
        _
    $region16: #{tpu_custom_call.1} parent=5 // pred_fallthru
      _
    %p159 = scmp.le.s32.totalorder 1, %s8
    %p160 = scmp.lt.s32.totalorder %s8, 3
    %p161 = pnand %p159, %p160
    %p162 = pneg %p161
    // Predicated region
    $region25: #{tpu_custom_call.1} parent=5 // pred_check
      _
    $region26: #{tpu_custom_call.1} parent=5 // pred_check_branch
      %164 = sbr.rel (%p161) target = $region28
    $region27: #{tpu_custom_call.1} parent=5 // pred_region
      %s165 = ssub.s32 %s8, 1
      %s166 = sadd.s32 %s17, %s18
      %p167 = scmp.lt.s32.totalorder %s166, 0
      %s168 = scalar_select %p167, %s166, 0
      %s169 = smul.u32 2, %s168
      %p170 = scmp.lt.s32.totalorder %s169, 1
      %s171 = scalar_select %p170, %s169, 1
      %s172 = smul.addr %s171, 8
      %s173 = scalar_lea.vmem %s0, %s172
      %p174 = pneg %p52
      %p175 = pneg %p49
      %s176 = sadd.s32 %s17, %s18
      %p177 = scmp.lt.s32.totalorder %s176, 0
      %s178 = scalar_select %p177, %s176, 0
      %s179 = smul.u32 2, %s178
      %p180 = scmp.lt.s32.totalorder %s179, 1
      %s181 = scalar_select %p180, %s179, 1
      %s182 = smul.addr %s181, 8
      %s183 = scalar_lea.vmem %s1, %s182
      %p184 = pneg %p84
      %p185 = pneg %p81
      %p186 = pneg %p110
      %p187 = pneg %p107
      %p188 = scmp.lt.s32.totalorder %s17, 1
      %s189 = scalar_select %p188, %s17, 1
      %s190 = scalar_lea.vmem %s2, %s189
      %s191 = sadd.s32 %s17, %s18
      %p192 = scmp.lt.s32.totalorder %s191, 0
      %s193 = scalar_select %p192, %s191, 0
      %s194 = smul.u32 2, %s193
      %p195 = scmp.lt.s32.totalorder %s194, 1
      %s196 = scalar_select %p195, %s194, 1
      %s197 = smul.addr %s196, 8
      %s198 = scalar_lea.vmem %s0, %s197
      %s199 = sadd.s32 %s17, %s18
      %p200 = scmp.lt.s32.totalorder %s199, 0
      %s201 = scalar_select %p200, %s199, 0
      %s202 = smul.u32 2, %s201
      %s203 = sadd.s32 %s17, %s18
      %p204 = scmp.lt.s32.totalorder %s203, 0
      %s205 = scalar_select %p204, %s203, 0
      %s206 = smul.u32 2, %s205
      %p207 = scmp.lt.s32.totalorder %s206, 1
      %s208 = scalar_select %p207, %s206, 1
      %s209 = smul.addr %s208, 8
      %s210 = scalar_lea.vmem %s1, %s209
      %s211 = sadd.s32 %s17, %s18
      %p212 = scmp.lt.s32.totalorder %s211, 0
      %s213 = scalar_select %p212, %s211, 0
      %s214 = smul.u32 2, %s213
      %p215 = scmp.lt.s32.totalorder %s17, 1
      %s216 = scalar_select %p215, %s17, 1
      %s217 = scalar_lea.vmem %s2, %s216
      %p218 = scmp.eq.s32.totalorder %s18, 0
      // Predicated region
      $region29: #{tpu_custom_call.1} parent=27 // pred_check
        %p219 = pneg %p218
      $region30: #{tpu_custom_call.1} parent=27 // pred_check_branch
        %221 = sbr.rel (%p219) target = $region32
      $region31: #{tpu_custom_call.1} parent=27 // pred_region
        %vm222 = vcmask 7168
        %223 = vst.msk [vmem:[#allocation2] sm:$0xff] %vm222, 0.0
        %224 = vst.msk [vmem:[#allocation2 + $0x8] sm:$0xff] %vm222, 0.0
      $region32: #{tpu_custom_call.1} parent=27 // pred_fallthru
        _
      %s225 = sadd.s32 %s17, %s18
      %s226 = smul.u32 %s225, 16
      %v227 = vlaneseq
      %v228 = vand.u32 %v227, 127
      %v229 = vlaneseq
      %v230 = vshrl.u32 %v229, 7
      %v231 = vadd.s32 %v230, 8
      %v232 = vld [vmem:[%s198] sm:$0xff]
      %v233 = vld [vmem:[%s198 + $0x8] sm:$0xff]
      %v234 = vld [vmem:[%s210] sm:$0xff]
      %v235 = vld [vmem:[%s210 + $0x8] sm:$0xff]
      %vm236 = vcmask 261120
      %v237 = vsel %vm236, %v232, -inf
      %238 = vmax.xlane.f32.xlu0 %v237
      %v239 = vpop.xlane.xlu0 %238
      %v240 = vsel %vm236, %v233, -inf
      %241 = vmax.xlane.f32.xlu0 %v240
      %v242 = vpop.xlane.xlu0 %241
      %v243 = vsub.f32 %v232, %v239
      %v244 = vsub.f32 %v233, %v242
      %v245 = vmul.f32 %v243, 1.442695
      %v246 = vpow.pop %v245
      %v247 = vmul.f32 %v244, 1.442695
      %v248 = vpow.pop %v247
      %v249 = vsel %vm236, %v246, 0.0
      %250 = vadd.xlane.f32.xlu0 %v249
      %v251 = vpop.xlane.xlu0 %250
      %v252 = vsel %vm236, %v248, 0.0
      %253 = vadd.xlane.f32.xlu0 %v252
      %v254 = vpop.xlane.xlu0 %253
      %v255 = vlog2.pop %v251
      %v256 = vmul.f32 %v255, 0.6931472
      %v257 = vlog2.pop %v254
      %v258 = vmul.f32 %v257, 0.6931472
      %v259 = vadd.f32 %v256, %v239
      %v260 = vadd.f32 %v258, %v242
      %261 = vset.pattern.permute.xlu0 0
      %262 = vperm.xlu0 %261, %v234
      %v263 = vpop.permute.xlu0 %262
      %264 = vset.pattern.permute.xlu0 0
      %265 = vperm.xlu0 %264, %v235
      %v266 = vpop.permute.xlu0 %265
      %vm267 = vcmp.eq.s32.totalorder %v228, %v263
      %vm268 = vcmp.eq.s32.totalorder %v228, %v266
      %v269 = vsel %vm267, %v232, 0.0
      %v270 = vsel %vm268, %v233, 0.0
      %v271 = vsel %vm236, %v269, 0.0
      %272 = vadd.xlane.f32.xlu0 %v271
      %v273 = vpop.xlane.xlu0 %272
      %v274 = vsel %vm236, %v270, 0.0
      %275 = vadd.xlane.f32.xlu0 %v274
      %v276 = vpop.xlane.xlu0 %275
      %v277 = vstv %s226
      %v278 = vadd.s32 %v277, %v230
      %v279 = vadd.s32 %v277, %v231
      %vm280 = vcmp.lt.s32.totalorder %v278, 16
      %vm281 = vcmp.lt.s32.totalorder %v279, 16
      %v282 = vld [vmem:[#allocation2] sm:$0xff]
      %v283 = vld [vmem:[#allocation2 + $0x8] sm:$0xff]
      %v284 = vsub.f32 %v259, %v273
      %v285 = vsub.f32 %v260, %v276
      %v286 = vsel %vm280, %v284, 0.0
      %v287 = vsel %vm281, %v285, 0.0
      %v288 = vadd.f32 %v282, %v286
      %v289 = vadd.f32 %v283, %v287
      %vm290 = vcmask 7168
      %291 = vst.msk [vmem:[#allocation2] sm:$0xff] %vm290, %v288
      %292 = vst.msk [vmem:[#allocation2 + $0x8] sm:$0xff] %vm290, %v289
      // Predicated region
      $region33: #{tpu_custom_call.1} parent=27 // pred_check
        %p293 = pneg %p218
      $region34: #{tpu_custom_call.1} parent=27 // pred_check_branch
        %295 = sbr.rel (%p293) target = $region36
      $region35: #{tpu_custom_call.1} parent=27 // pred_region
        %v296 = vld [vmem:[#allocation2] sm:$0xff]
        %v297 = vld [vmem:[#allocation2 + $0x8] sm:$0xff]
        %v298 = vsel %vm290, %v296, 0.0
        %v299 = vsel %vm290, %v297, 0.0
        %v300 = vadd.f32 %v298, %v299
        %301 = vadd.xlane.f32.xlu0 %v300
        %v302 = vpop.xlane.xlu0 %301
        %v303 = vrot.slane %v302, 4
        %v304 = vadd.f32 %v302, %v303
        %v305 = vrot.slane %v304, 2
        %v306 = vadd.f32 %v304, %v305
        %v307 = vrot.slane %v306, 1
        %v308 = vadd.f32 %v306, %v307
        %s309 = vtos %v308
        %v310 = vstv %s309
        %vm311 = vcmask 0
        %312 = vst.msk [vmem:[%s217] sm:$0x1] %vm311, %v310
      $region36: #{tpu_custom_call.1} parent=27 // pred_fallthru
        _
      %p313 = scmp.lt.s32.totalorder %s17, 1
      %s314 = scalar_select %p313, %s17, 1
      %s315 = scalar_lea.vmem %s2, %s314
      // Predicated region
      $region37: #{tpu_custom_call.1} parent=27 // pred_check
        %p316 = pneg %p107
      $region38: #{tpu_custom_call.1} parent=27 // pred_check_branch
        %318 = sbr.rel (%p316) target = $region40
      $region39: #{tpu_custom_call.1} parent=27 // pred_region
        _
      $region40: #{tpu_custom_call.1} parent=27 // pred_fallthru
        _
    $region28: #{tpu_custom_call.1} parent=5 // pred_fallthru
      _
    %p319 = scmp.le.s32.totalorder 2, %s8
    // Predicated region
    $region41: #{tpu_custom_call.1} parent=5 // pred_check
      %p320 = pneg %p319
    $region42: #{tpu_custom_call.1} parent=5 // pred_check_branch
      %322 = sbr.rel (%p320) target = $region44
    $region43: #{tpu_custom_call.1} parent=5 // pred_region
      %s323 = ssub.s32 %s8, 2
      // Predicated region
      $region45: #{tpu_custom_call.1} parent=43 // pred_check
        %p324 = pneg %p113
      $region46: #{tpu_custom_call.1} parent=43 // pred_check_branch
        %326 = sbr.rel (%p324) target = $region48
      $region47: #{tpu_custom_call.1} parent=43 // pred_region
        %p327 = scmp.lt.s32.totalorder %s19, 1
        %s328 = scalar_select %p327, %s19, 1
        %s329 = scalar_lea.vmem %s2, %s328
      $region48: #{tpu_custom_call.1} parent=43 // pred_fallthru
        _
    $region44: #{tpu_custom_call.1} parent=5 // pred_fallthru
      _
  $region6: #{tpu_custom_call.1} parent=0 // loop_footer
    %s12 = sadd.s32 1, %s8
  $region7: #{tpu_custom_call.1} parent=0 // loop_footer_branch
    %7 = sbr.rel target = $region3
  $region8: #{tpu_custom_call.1} parent=0 // loop_exit
    _

</llo_original>
